<compile_context>
chip_gen: v6e
topology: v6e:2x2x1
jax: 0.10.0
libtpu: 0.0.40
codegen_flags: <defaults>
</compile_context>

<pallas_src>
import jax
import jax.numpy as jnp
from jax.experimental import pallas as pl
from jax.experimental.pallas import tpu as pltpu

HIDDE_SIZE_OUT = 8
_LANE = 128
_TILE_CAP = 16384               # lane width per grid step (review: raise cap)
_SMALL_EMBED = 16               # <=: VPU select-sum; >: fused one-hot MXU dot
_ONE_HOT_VMEM_BYTES = 8 << 20   # bound on the [H+DISCR, TB] f32 stack
_VMEM_LIMIT_BYTES = 48 << 20    # explicit scoped-VMEM limit (v5e default is 16 MiB)


def _cores_per_chip():
    """v4 / v5p (megacore) and v7x expose 2 TensorCores per JAX device."""
    try:
        kind = jax.devices()[0].device_kind.lower()
    except Exception:
        return 1
    for tag in ("v4", "v5p", "7"):
        if tag in kind:
            return 2
    return 1


_CORES_PER_CHIP = _cores_per_chip()


# ----------------------------------------------------------------------------
# Kernels (batch on the lane axis)
# ----------------------------------------------------------------------------
def _mlp_trunk(x_ref, w1T_ref, b1_ref, w2T_ref, b2_ref):
    """Shared first two layers.  x_ref rows 0..1 are the continuous features."""
    x = x_ref[...]                                     # [2 or 3, TB] f32
    w1T = w1T_ref[...]                                 # [H, 2]
    # Layer 1 (K=2): VPU broadcast-FMA instead of a tiny MXU matmul.
    h = jnp.maximum(
        w1T[:, 0:1] * x[0:1, :] + w1T[:, 1:2] * x[1:2, :] + b1_ref[...],
        0.0)                                           # [H, TB]
    # Layer 2 (HxH): the one matmul worth keeping on the MXU.
    h = jnp.maximum(
        jnp.dot(w2T_ref[...], h, preferred_element_type=jnp.float32)
        + b2_ref[...], 0.0)                            # [H, TB]
    return x, h


def _critic_discr_small_kernel(x_ref,
                               w1T_ref, b1_ref, w2T_ref, b2_ref,
                               w3fT_ref, bf_ref, embfT_ref,
                               out_ref):
    """Discrete-state branch, tiny embedding table (VPU select-sum)."""
    x, h = _mlp_trunk(x_ref, w1T_ref, b1_ref, w2T_ref, b2_ref)
    out = (jnp.dot(w3fT_ref[...], h, preferred_element_type=jnp.float32)
           + bf_ref[...])                              # [OUT, TB]
    idx = x[2:3, :].astype(jnp.int32)                  # [1, TB]
    embfT = embfT_ref[...]                             # [OUT, DISCR]
    for d in range(embfT.shape[1]):                    # static unroll
        # Select the folded-embedding column directly (no mask*value multiply).
        out = out + jnp.where(idx == d, embfT[:, d:d + 1], 0.0)
    out_ref[...] = out


def _critic_discr_big_kernel(x_ref,
                             w1T_ref, b1_ref, w2T_ref, b2_ref,
                             wcatT_ref, bf_ref,
                             out_ref):
    """Discrete-state branch, larger table: single fused MXU dot with
       wcatT = [w3@wo | embed@wo]^T against [h ; onehot]."""
    x, h = _mlp_trunk(x_ref, w1T_ref, b1_ref, w2T_ref, b2_ref)
    idx = x[2:3, :].astype(jnp.int32)                  # [1, TB]
    n_embed = wcatT_ref.shape[1] - h.shape[0]
    iota = jax.lax.broadcasted_iota(jnp.int32, (n_embed, idx.shape[1]), 0)
    onehot = (iota == idx).astype(jnp.float32)         # [DISCR, TB]
    stacked = jnp.concatenate([h, onehot], axis=0)     # [H+DISCR, TB]
    out_ref[...] = (
        jnp.dot(wcatT_ref[...], stacked, preferred_element_type=jnp.float32)
        + bf_ref[...])                                 # [OUT, TB]


def _critic_conti_kernel(x_ref,
                         w1T_ref, b1_ref, w2T_ref, b2_ref, w3T_ref, b3_ref,
                         out_ref):
    """Continuous-only branch: out = make_seq(x[:, 0:2]) in transposed layout."""
    _, h = _mlp_trunk(x_ref, w1T_ref, b1_ref, w2T_ref, b2_ref)
    out_ref[...] = (
        jnp.dot(w3T_ref[...], h, preferred_element_type=jnp.float32)
        + b3_ref[...])                                 # [OUT, TB]


# ----------------------------------------------------------------------------
# Wrapper helpers
# ----------------------------------------------------------------------------
def _round_up(n, m):
    return (n + m - 1) // m * m


def _plan_batch(batch, cap):
    """Pick (tile_b, n_steps, padded_batch).  The batch is padded up to a
    multiple of the tile so every grid step is a full, lane-dense tile."""
    bp0 = _round_up(max(batch, 1), _LANE)
    # Keep >= 2 parallel steps on dual-TensorCore chips (v4 / v5p / v7x).
    min_steps = 2 if (_CORES_PER_CHIP >= 2 and bp0 >= 2 * _LANE) else 1
    steps = max(min_steps, -(-bp0 // cap))
    tile = _round_up(-(-bp0 // steps), _LANE)
    return tile, steps, tile * steps


def _resident_spec(arr):
    # Whole (tiny) weight stays VMEM-resident across all grid iterations.
    return pl.BlockSpec(arr.shape, lambda i: (0, 0))


def _batch_spec(rows, tile_b):
    return pl.BlockSpec((rows, tile_b), lambda i: (0, i))


def _compiler_params():
    return pltpu.CompilerParams(
        dimension_semantics=("parallel",),
        vmem_limit_bytes=_VMEM_LIMIT_BYTES)


# ----------------------------------------------------------------------------
# Forward wrappers (whole thing jitted: pad + cast + transpose + kernel + slice)
# ----------------------------------------------------------------------------
def _critic_forward_discr_impl(x, p):
    out_size = p["wo"].shape[1]
    H = p["w2"].shape[0]
    n_embed = p["embed"].shape[0]

    # One-time algebraic fold + layout transpose (fused by XLA under jit).
    w1T, b1 = p["w1"].T, p["b1"].T                     # [H, 2], [H, 1]
    w2T, b2 = p["w2"].T, p["b2"].T                     # [H, H], [H, 1]
    w3fT = (p["w3"] @ p["wo"]).T                       # [OUT, H]
    bfT = (p["b3"] @ p["wo"] + p["bo"]).T              # [OUT, 1]
    embfT = (p["embed"] @ p["wo"]).T                   # [OUT, DISCR]

    cap = _TILE_CAP
    if n_embed > _SMALL_EMBED:
        # Bound the [H+DISCR, TB] one-hot stack (v7x has 64 MiB VMEM / TC).
        cap = min(cap, max(_LANE,
                           (_ONE_HOT_VMEM_BYTES // (4 * n_embed)) // _LANE * _LANE))
    B = x.shape[0]
    tile_b, steps, Bp = _plan_batch(B, cap)

    # Packed input slab: rows 0-1 continuous, row 2 the discrete index (float).
    # TODO(synk): indices >= 2**24 lose precision because the module's
    #             interface carries them in float32 (x[:, 2].long()).
    slab = jnp.pad(x[:, 0:3].astype(jnp.float32).T, ((0, 0), (0, Bp - B)))

    if n_embed <= _SMALL_EMBED:
        kernel = _critic_discr_small_kernel
        weights = [w1T, b1, w2T, b2, w3fT, bfT, embfT]
    else:
        kernel = _critic_discr_big_kernel
        wcatT = jnp.concatenate([w3fT, embfT], axis=1)  # [OUT, H+DISCR]
        weights = [w1T, b1, w2T, b2, wcatT, bfT]

    flops = 2 * Bp * (2 * H + H * H + (H + n_embed) * out_size)
    bytes_accessed = 4 * (slab.size + Bp * out_size
                          + sum(w.size for w in weights))

    outT = pl.pallas_call(
        kernel,
        out_shape=jax.ShapeDtypeStruct((out_size, Bp), jnp.float32),
        grid=(steps,),
        in_specs=[_batch_spec(3, tile_b)] + [_resident_spec(w) for w in weights],
        out_specs=pl.BlockSpec((out_size, tile_b), lambda i: (0, i)),
        compiler_params=_compiler_params(),
        cost_estimate=pl.CostEstimate(flops=flops, transcendentals=0,
                                      bytes_accessed=bytes_accessed),
    )(slab, *weights)
    return outT[:, :B].T                               # back to [B, out]


def _critic_forward_conti_impl(x, p):
    out_size = p["b3"].shape[1]
    H = p["w2"].shape[0]

    w1T, b1 = p["w1"].T, p["b1"].T
    w2T, b2 = p["w2"].T, p["b2"].T
    w3T, b3 = p["w3"].T, p["b3"].T

    B = x.shape[0]
    tile_b, steps, Bp = _plan_batch(B, _TILE_CAP)
    slab = jnp.pad(x[:, 0:2].astype(jnp.float32).T, ((0, 0), (0, Bp - B)))
    weights = [w1T, b1, w2T, b2, w3T, b3]

    flops = 2 * Bp * (2 * H + H * H + H * out_size)
    bytes_accessed = 4 * (slab.size + Bp * out_size
                          + sum(w.size for w in weights))

    outT = pl.pallas_call(
        _critic_conti_kernel,
        out_shape=jax.ShapeDtypeStruct((out_size, Bp), jnp.float32),
        grid=(steps,),
        in_specs=[_batch_spec(2, tile_b)] + [_resident_spec(w) for w in weights],
        out_specs=pl.BlockSpec((out_size, tile_b), lambda i: (0, i)),
        compiler_params=_compiler_params(),
        cost_estimate=pl.CostEstimate(flops=flops, transcendentals=0,
                                      bytes_accessed=bytes_accessed),
    )(slab, *weights)
    return outT[:, :B].T


critic_forward_discr = jax.jit(_critic_forward_discr_impl)
critic_forward_conti = jax.jit(_critic_forward_conti_impl)


# ----------------------------------------------------------------------------
# Deterministic parameter init (matches module __init__ shapes)
# ----------------------------------------------------------------------------
def init_params(key, state_size, out_size, discr_size, hidde_size,
                is_discr_state):
    ks = jax.random.split(key, 10)
    in_conti = state_size - 1
    mlp_out = HIDDE_SIZE_OUT if is_discr_state else out_size

    def lin(k, fan_in, fan_out):
        kw, kb = jax.random.split(k)
        bound = 1.0 / jnp.sqrt(fan_in)
        w = jax.random.uniform(kw, (fan_in, fan_out), jnp.float32,
                               -bound, bound)
        b = jax.random.uniform(kb, (1, fan_out), jnp.float32, -bound, bound)
        return w, b

    p = {}
    p["w1"], p["b1"] = lin(ks[0], in_conti, hidde_size)
    p["w2"], p["b2"] = lin(ks[1], hidde_size, hidde_size)
    p["w3"], p["b3"] = lin(ks[2], hidde_size, mlp_out)
    if is_discr_state:
        p["embed"] = jax.random.normal(ks[3], (discr_size, HIDDE_SIZE_OUT),
                                       jnp.float32)
        p["wo"], p["bo"] = lin(ks[4], HIDDE_SIZE_OUT, out_size)
    return p


# ----------------------------------------------------------------------------
# Pure-JAX reference (unfolded, matches the torch module exactly)
# ----------------------------------------------------------------------------
def ref_forward_discr(x, p):
    conti = x[:, 0:2]
    h = jnp.maximum(conti @ p["w1"] + p["b1"], 0.0)
    h = jnp.maximum(h @ p["w2"] + p["b2"], 0.0)
    hc = h @ p["w3"] + p["b3"]
    idx = x[:, 2].astype(jnp.int32)
    he = p["embed"][idx]
    return (hc + he) @ p["wo"] + p["bo"]


def ref_forward_conti(x, p):
    conti = x[:, 0:2]
    h = jnp.maximum(conti @ p["w1"] + p["b1"], 0.0)
    h = jnp.maximum(h @ p["w2"] + p["b2"], 0.0)
    return h @ p["w3"] + p["b3"]


# ----------------------------------------------------------------------------
if __name__ == "__main__":
    key = jax.random.PRNGKey(0)
    k_x, k_idx, k_p1, k_p2, k_p3, k_x2, k_idx2 = jax.random.split(key, 7)

    # Small shapes consistent with the module: state_size=3 (2 continuous
    # features + 1 discrete index), out_size=4, discr_size=5, hidden=32.
    B, state_size, out_size, discr_size, hidde_size = 8, 3, 4, 5, 32

    conti = jax.random.normal(k_x, (B, 2), jnp.float32)
    idx = jax.random.randint(k_idx, (B, 1), 0, discr_size).astype(jnp.float32)
    x = jnp.concatenate([conti, idx], axis=1)          # [B, state_size]

    # --- discrete-state branch, tiny embedding table (VPU select path) ---
    p_d = init_params(k_p1, state_size, out_size, discr_size, hidde_size,
                      is_discr_state=True)
    out_d = jax.block_until_ready(critic_forward_discr(x, p_d))
    ref_d = ref_forward_discr(x, p_d)
    assert out_d.shape == (B, out_size)
    assert jnp.allclose(out_d, ref_d, atol=1e-4, rtol=1e-4)

    # --- discrete-state branch, larger table (fused one-hot MXU path) ---
    big_discr = 24
    idx_b = jax.random.randint(k_idx2, (B, 1), 0, big_discr).astype(jnp.float32)
    x_b = jnp.concatenate([conti, idx_b], axis=1)
    p_b = init_params(k_p3, state_size, out_size, big_discr, hidde_size,
                      is_discr_state=True)
    out_b = jax.block_until_ready(critic_forward_discr(x_b, p_b))
    ref_b = ref_forward_discr(x_b, p_b)
    assert out_b.shape == (B, out_size)
    assert jnp.allclose(out_b, ref_b, atol=1e-4, rtol=1e-4)

    # --- continuous-only branch, non-multiple-of-128 batch (padding path) ---
    B2 = 300
    x2 = jax.random.normal(k_x2, (B2, state_size), jnp.float32)
    p_c = init_params(k_p2, state_size, out_size, None, hidde_size,
                      is_discr_state=False)
    out_c = jax.block_until_ready(critic_forward_conti(x2, p_c))
    ref_c = ref_forward_conti(x2, p_c)
    assert out_c.shape == (B2, out_size)
    assert jnp.allclose(out_c, ref_c, atol=1e-4, rtol=1e-4)

    print("KERNEL_OK")
</pallas_src>

<mosaic_0001>
module attributes {stable_mosaic.version = 11 : i64} {
  func.func @_critic_discr_small_kernel(%arg0: i32, %arg1: memref<3x128xf32, #tpu.memory_space<vmem>>, %arg2: memref<32x2xf32, #tpu.memory_space<vmem>>, %arg3: memref<32x1xf32, #tpu.memory_space<vmem>>, %arg4: memref<32x32xf32, #tpu.memory_space<vmem>>, %arg5: memref<32x1xf32, #tpu.memory_space<vmem>>, %arg6: memref<4x32xf32, #tpu.memory_space<vmem>>, %arg7: memref<4x1xf32, #tpu.memory_space<vmem>>, %arg8: memref<4x5xf32, #tpu.memory_space<vmem>>, %arg9: memref<4x128xf32, #tpu.memory_space<vmem>>) attributes {dimension_semantics = [#tpu.dimension_semantics<parallel>], iteration_bounds = array<i64: 1>, scalar_prefetch = 0 : i64, scratch_operands = 0 : i64, tpu.core_type = #tpu.core_type<tc>, window_params = [{transform_indices = @transform_0, window_bounds = array<i64: 3, 128>}, {pipeline_mode = #tpu.pipeline_mode<synchronous>, transform_indices = @transform_1, window_bounds = array<i64: 32, 2>}, {pipeline_mode = #tpu.pipeline_mode<synchronous>, transform_indices = @transform_2, window_bounds = array<i64: 32, 1>}, {pipeline_mode = #tpu.pipeline_mode<synchronous>, transform_indices = @transform_3, window_bounds = array<i64: 32, 32>}, {pipeline_mode = #tpu.pipeline_mode<synchronous>, transform_indices = @transform_4, window_bounds = array<i64: 32, 1>}, {pipeline_mode = #tpu.pipeline_mode<synchronous>, transform_indices = @transform_5, window_bounds = array<i64: 4, 32>}, {pipeline_mode = #tpu.pipeline_mode<synchronous>, transform_indices = @transform_6, window_bounds = array<i64: 4, 1>}, {pipeline_mode = #tpu.pipeline_mode<synchronous>, transform_indices = @transform_7, window_bounds = array<i64: 4, 5>}, {transform_indices = @transform_8, window_bounds = array<i64: 4, 128>}]} {
    %c0 = arith.constant 0 : index
    %c0_0 = arith.constant 0 : index
    %0 = vector.load %arg1[%c0, %c0_0] : memref<3x128xf32, #tpu.memory_space<vmem>>, vector<3x128xf32>
    %c0_1 = arith.constant 0 : index
    %c0_2 = arith.constant 0 : index
    %1 = vector.load %arg2[%c0_1, %c0_2] : memref<32x2xf32, #tpu.memory_space<vmem>>, vector<32x2xf32>
    %2 = vector.extract_strided_slice %1 {offsets = [0, 0], sizes = [32, 1], strides = [1, 1]} : vector<32x2xf32> to vector<32x1xf32>
    %3 = vector.extract_strided_slice %0 {offsets = [0, 0], sizes = [1, 128], strides = [1, 1]} : vector<3x128xf32> to vector<1x128xf32>
    %4 = vector.broadcast %2 : vector<32x1xf32> to vector<32x128xf32>
    %5 = vector.broadcast %3 : vector<1x128xf32> to vector<32x128xf32>
    %6 = arith.mulf %4, %5 : vector<32x128xf32>
    %7 = vector.extract_strided_slice %1 {offsets = [0, 1], sizes = [32, 1], strides = [1, 1]} : vector<32x2xf32> to vector<32x1xf32>
    %8 = vector.extract_strided_slice %0 {offsets = [1, 0], sizes = [1, 128], strides = [1, 1]} : vector<3x128xf32> to vector<1x128xf32>
    %9 = vector.broadcast %7 : vector<32x1xf32> to vector<32x128xf32>
    %10 = vector.broadcast %8 : vector<1x128xf32> to vector<32x128xf32>
    %11 = arith.mulf %9, %10 : vector<32x128xf32>
    %12 = arith.addf %6, %11 : vector<32x128xf32>
    %c0_3 = arith.constant 0 : index
    %c0_4 = arith.constant 0 : index
    %13 = vector.load %arg3[%c0_3, %c0_4] : memref<32x1xf32, #tpu.memory_space<vmem>>, vector<32x1xf32>
    %14 = vector.broadcast %13 : vector<32x1xf32> to vector<32x128xf32>
    %15 = arith.addf %12, %14 : vector<32x128xf32>
    %cst = arith.constant 0.000000e+00 : f32
    %16 = vector.broadcast %cst : f32 to vector<32x128xf32>
    %17 = arith.maximumf %15, %16 : vector<32x128xf32>
    %c0_5 = arith.constant 0 : index
    %c0_6 = arith.constant 0 : index
    %18 = vector.load %arg4[%c0_5, %c0_6] : memref<32x32xf32, #tpu.memory_space<vmem>>, vector<32x32xf32>
    %cst_7 = arith.constant dense<0.000000e+00> : vector<32x128xf32>
    %19 = tpu.matmul %18, %17, %cst_7 {dimension_numbers = #tpu.dot_dimension_numbers<[1], [0], [0], [1], [0, 0, 1, 1], [], []>} : vector<32x32xf32>, vector<32x128xf32>, vector<32x128xf32> -> vector<32x128xf32>
    %c0_8 = arith.constant 0 : index
    %c0_9 = arith.constant 0 : index
    %20 = vector.load %arg5[%c0_8, %c0_9] : memref<32x1xf32, #tpu.memory_space<vmem>>, vector<32x1xf32>
    %21 = vector.broadcast %20 : vector<32x1xf32> to vector<32x128xf32>
    %22 = arith.addf %19, %21 : vector<32x128xf32>
    %cst_10 = arith.constant 0.000000e+00 : f32
    %23 = vector.broadcast %cst_10 : f32 to vector<32x128xf32>
    %24 = arith.maximumf %22, %23 : vector<32x128xf32>
    %c0_11 = arith.constant 0 : index
    %c0_12 = arith.constant 0 : index
    %25 = vector.load %arg6[%c0_11, %c0_12] : memref<4x32xf32, #tpu.memory_space<vmem>>, vector<4x32xf32>
    %cst_13 = arith.constant dense<0.000000e+00> : vector<4x128xf32>
    %26 = tpu.matmul %25, %24, %cst_13 {dimension_numbers = #tpu.dot_dimension_numbers<[1], [0], [0], [1], [0, 0, 1, 1], [], []>} : vector<4x32xf32>, vector<32x128xf32>, vector<4x128xf32> -> vector<4x128xf32>
    %c0_14 = arith.constant 0 : index
    %c0_15 = arith.constant 0 : index
    %27 = vector.load %arg7[%c0_14, %c0_15] : memref<4x1xf32, #tpu.memory_space<vmem>>, vector<4x1xf32>
    %28 = vector.broadcast %27 : vector<4x1xf32> to vector<4x128xf32>
    %29 = arith.addf %26, %28 : vector<4x128xf32>
    %30 = vector.extract_strided_slice %0 {offsets = [2, 0], sizes = [1, 128], strides = [1, 1]} : vector<3x128xf32> to vector<1x128xf32>
    %31 = arith.fptosi %30 : vector<1x128xf32> to vector<1x128xi32>
    %c0_16 = arith.constant 0 : index
    %c0_17 = arith.constant 0 : index
    %32 = vector.load %arg8[%c0_16, %c0_17] : memref<4x5xf32, #tpu.memory_space<vmem>>, vector<4x5xf32>
    %c0_i32 = arith.constant 0 : i32
    %33 = vector.broadcast %c0_i32 : i32 to vector<1x128xi32>
    %34 = arith.cmpi eq, %31, %33 : vector<1x128xi32>
    %35 = vector.extract_strided_slice %32 {offsets = [0, 0], sizes = [4, 1], strides = [1, 1]} : vector<4x5xf32> to vector<4x1xf32>
    %cst_18 = arith.constant 0.000000e+00 : f32
    %36 = vector.shape_cast %34 : vector<1x128xi1> to vector<1x128xi1>
    %37 = vector.broadcast %36 : vector<1x128xi1> to vector<4x128xi1>
    %38 = vector.shape_cast %35 : vector<4x1xf32> to vector<4x1xf32>
    %39 = vector.broadcast %38 : vector<4x1xf32> to vector<4x128xf32>
    %40 = vector.broadcast %cst_18 : f32 to vector<4x128xf32>
    %41 = arith.select %37, %39, %40 : vector<4x128xi1>, vector<4x128xf32>
    %42 = arith.addf %29, %41 : vector<4x128xf32>
    %c1_i32 = arith.constant 1 : i32
    %43 = vector.broadcast %c1_i32 : i32 to vector<1x128xi32>
    %44 = arith.cmpi eq, %31, %43 : vector<1x128xi32>
    %45 = vector.extract_strided_slice %32 {offsets = [0, 1], sizes = [4, 1], strides = [1, 1]} : vector<4x5xf32> to vector<4x1xf32>
    %cst_19 = arith.constant 0.000000e+00 : f32
    %46 = vector.shape_cast %44 : vector<1x128xi1> to vector<1x128xi1>
    %47 = vector.broadcast %46 : vector<1x128xi1> to vector<4x128xi1>
    %48 = vector.shape_cast %45 : vector<4x1xf32> to vector<4x1xf32>
    %49 = vector.broadcast %48 : vector<4x1xf32> to vector<4x128xf32>
    %50 = vector.broadcast %cst_19 : f32 to vector<4x128xf32>
    %51 = arith.select %47, %49, %50 : vector<4x128xi1>, vector<4x128xf32>
    %52 = arith.addf %42, %51 : vector<4x128xf32>
    %c2_i32 = arith.constant 2 : i32
    %53 = vector.broadcast %c2_i32 : i32 to vector<1x128xi32>
    %54 = arith.cmpi eq, %31, %53 : vector<1x128xi32>
    %55 = vector.extract_strided_slice %32 {offsets = [0, 2], sizes = [4, 1], strides = [1, 1]} : vector<4x5xf32> to vector<4x1xf32>
    %cst_20 = arith.constant 0.000000e+00 : f32
    %56 = vector.shape_cast %54 : vector<1x128xi1> to vector<1x128xi1>
    %57 = vector.broadcast %56 : vector<1x128xi1> to vector<4x128xi1>
    %58 = vector.shape_cast %55 : vector<4x1xf32> to vector<4x1xf32>
    %59 = vector.broadcast %58 : vector<4x1xf32> to vector<4x128xf32>
    %60 = vector.broadcast %cst_20 : f32 to vector<4x128xf32>
    %61 = arith.select %57, %59, %60 : vector<4x128xi1>, vector<4x128xf32>
    %62 = arith.addf %52, %61 : vector<4x128xf32>
    %c3_i32 = arith.constant 3 : i32
    %63 = vector.broadcast %c3_i32 : i32 to vector<1x128xi32>
    %64 = arith.cmpi eq, %31, %63 : vector<1x128xi32>
    %65 = vector.extract_strided_slice %32 {offsets = [0, 3], sizes = [4, 1], strides = [1, 1]} : vector<4x5xf32> to vector<4x1xf32>
    %cst_21 = arith.constant 0.000000e+00 : f32
    %66 = vector.shape_cast %64 : vector<1x128xi1> to vector<1x128xi1>
    %67 = vector.broadcast %66 : vector<1x128xi1> to vector<4x128xi1>
    %68 = vector.shape_cast %65 : vector<4x1xf32> to vector<4x1xf32>
    %69 = vector.broadcast %68 : vector<4x1xf32> to vector<4x128xf32>
    %70 = vector.broadcast %cst_21 : f32 to vector<4x128xf32>
    %71 = arith.select %67, %69, %70 : vector<4x128xi1>, vector<4x128xf32>
    %72 = arith.addf %62, %71 : vector<4x128xf32>
    %c4_i32 = arith.constant 4 : i32
    %73 = vector.broadcast %c4_i32 : i32 to vector<1x128xi32>
    %74 = arith.cmpi eq, %31, %73 : vector<1x128xi32>
    %75 = vector.extract_strided_slice %32 {offsets = [0, 4], sizes = [4, 1], strides = [1, 1]} : vector<4x5xf32> to vector<4x1xf32>
    %cst_22 = arith.constant 0.000000e+00 : f32
    %76 = vector.shape_cast %74 : vector<1x128xi1> to vector<1x128xi1>
    %77 = vector.broadcast %76 : vector<1x128xi1> to vector<4x128xi1>
    %78 = vector.shape_cast %75 : vector<4x1xf32> to vector<4x1xf32>
    %79 = vector.broadcast %78 : vector<4x1xf32> to vector<4x128xf32>
    %80 = vector.broadcast %cst_22 : f32 to vector<4x128xf32>
    %81 = arith.select %77, %79, %80 : vector<4x128xi1>, vector<4x128xf32>
    %82 = arith.addf %72, %81 : vector<4x128xf32>
    %c0_23 = arith.constant 0 : index
    %c0_24 = arith.constant 0 : index
    %83 = vector.load %arg9[%c0_23, %c0_24] : memref<4x128xf32, #tpu.memory_space<vmem>>, vector<4x128xf32>
    tpu.vector_store %arg9[%c0_23, %c0_24], %82 {strides = array<i32>} : memref<4x128xf32, #tpu.memory_space<vmem>>, vector<4x128xf32>,
    return
  }
  func.func @transform_0(%arg0: i32) -> (i32, i32) {
    %c0_i32 = arith.constant 0 : i32
    %c0_i32_0 = arith.constant 0 : i32
    return %c0_i32, %arg0 : i32, i32
  }
  func.func @transform_1(%arg0: i32) -> (i32, i32) {
    %c0_i32 = arith.constant 0 : i32
    %c0_i32_0 = arith.constant 0 : i32
    %c0_i32_1 = arith.constant 0 : i32
    return %c0_i32, %c0_i32_0 : i32, i32
  }
  func.func @transform_2(%arg0: i32) -> (i32, i32) {
    %c0_i32 = arith.constant 0 : i32
    %c0_i32_0 = arith.constant 0 : i32
    %c0_i32_1 = arith.constant 0 : i32
    return %c0_i32, %c0_i32_0 : i32, i32
  }
  func.func @transform_3(%arg0: i32) -> (i32, i32) {
    %c0_i32 = arith.constant 0 : i32
    %c0_i32_0 = arith.constant 0 : i32
    %c0_i32_1 = arith.constant 0 : i32
    return %c0_i32, %c0_i32_0 : i32, i32
  }
  func.func @transform_4(%arg0: i32) -> (i32, i32) {
    %c0_i32 = arith.constant 0 : i32
    %c0_i32_0 = arith.constant 0 : i32
    %c0_i32_1 = arith.constant 0 : i32
    return %c0_i32, %c0_i32_0 : i32, i32
  }
  func.func @transform_5(%arg0: i32) -> (i32, i32) {
    %c0_i32 = arith.constant 0 : i32
    %c0_i32_0 = arith.constant 0 : i32
    %c0_i32_1 = arith.constant 0 : i32
    return %c0_i32, %c0_i32_0 : i32, i32
  }
  func.func @transform_6(%arg0: i32) -> (i32, i32) {
    %c0_i32 = arith.constant 0 : i32
    %c0_i32_0 = arith.constant 0 : i32
    %c0_i32_1 = arith.constant 0 : i32
    return %c0_i32, %c0_i32_0 : i32, i32
  }
  func.func @transform_7(%arg0: i32) -> (i32, i32) {
    %c0_i32 = arith.constant 0 : i32
    %c0_i32_0 = arith.constant 0 : i32
    %c0_i32_1 = arith.constant 0 : i32
    return %c0_i32, %c0_i32_0 : i32, i32
  }
  func.func @transform_8(%arg0: i32) -> (i32, i32) {
    %c0_i32 = arith.constant 0 : i32
    %c0_i32_0 = arith.constant 0 : i32
    return %c0_i32, %arg0 : i32, i32
  }
}

</mosaic_0001>

<llo_original>
// kernel: _critic_forward_discr_impl.1
$region0: #{_critic_forward_discr_impl.1}
  #allocation0 [shape = 'u32[]', space=smem, size = 0x4, offset = 0x4, fixed_abs, tag = 'smem constant byte address 0x4 - core index']
  #allocation1 [shape = 'u32[144,128]{1,0:T(1,128)}', space=vmem, size = 0x12000, scoped, tag = 'internal scratch']
  %s0 = inlined_call_operand.vmem [shape: f32[3,128], index: 0, kind: input, shape index: {}]
  %s1 = inlined_call_operand.vmem [shape: f32[32,2], index: 1, kind: input, shape index: {}]
  %s2 = inlined_call_operand.vmem [shape: f32[32,1], index: 2, kind: input, shape index: {}]
  %s3 = inlined_call_operand.vmem [shape: f32[32,32], index: 3, kind: input, shape index: {}]
  %s4 = inlined_call_operand.vmem [shape: f32[32,1], index: 4, kind: input, shape index: {}]
  %s5 = inlined_call_operand.vmem [shape: f32[4,32], index: 5, kind: input, shape index: {}]
  %s6 = inlined_call_operand.vmem [shape: f32[4,1], index: 6, kind: input, shape index: {}]
  %s7 = inlined_call_operand.vmem [shape: f32[4,5], index: 7, kind: input, shape index: {}]
  %s8 = inlined_call_operand.vmem [shape: f32[4,128], index: 8, kind: output, shape index: {}]
  %s9 = sld [smem:[#allocation0]]
  $region42: #{_critic_forward_discr_impl.1} parent=0
    _
  %s11 = ssub.s32 1, %s9
  %s12 = scalar_select 0, %s11, %s9
  // Predicated region
  $region2: #{_critic_forward_discr_impl.1} parent=0 // pred_check
    _
  $region3: #{_critic_forward_discr_impl.1} parent=0 // pred_check_branch
    %14 = sbr.rel (0) target = $region5
  $region4: #{_critic_forward_discr_impl.1} parent=0 // pred_region
    _
  $region5: #{_critic_forward_discr_impl.1} parent=0 // pred_fallthru
    _
  // Predicated region
  $region6: #{_critic_forward_discr_impl.1} parent=0 // pred_check
    _
  $region7: #{_critic_forward_discr_impl.1} parent=0 // pred_check_branch
    %16 = sbr.rel (0) target = $region9
  $region8: #{_critic_forward_discr_impl.1} parent=0 // pred_region
    _
  $region9: #{_critic_forward_discr_impl.1} parent=0 // pred_fallthru
    _
  // Predicated region
  $region10: #{_critic_forward_discr_impl.1} parent=0 // pred_check
    _
  $region11: #{_critic_forward_discr_impl.1} parent=0 // pred_check_branch
    %18 = sbr.rel (0) target = $region13
  $region12: #{_critic_forward_discr_impl.1} parent=0 // pred_region
    _
  $region13: #{_critic_forward_discr_impl.1} parent=0 // pred_fallthru
    _
  // Predicated region
  $region14: #{_critic_forward_discr_impl.1} parent=0 // pred_check
    _
  $region15: #{_critic_forward_discr_impl.1} parent=0 // pred_check_branch
    %20 = sbr.rel (0) target = $region17
  $region16: #{_critic_forward_discr_impl.1} parent=0 // pred_region
    _
  $region17: #{_critic_forward_discr_impl.1} parent=0 // pred_fallthru
    _
  // Predicated region
  $region18: #{_critic_forward_discr_impl.1} parent=0 // pred_check
    _
  $region19: #{_critic_forward_discr_impl.1} parent=0 // pred_check_branch
    %22 = sbr.rel (0) target = $region21
  $region20: #{_critic_forward_discr_impl.1} parent=0 // pred_region
    _
  $region21: #{_critic_forward_discr_impl.1} parent=0 // pred_fallthru
    _
  // Predicated region
  $region22: #{_critic_forward_discr_impl.1} parent=0 // pred_check
    _
  $region23: #{_critic_forward_discr_impl.1} parent=0 // pred_check_branch
    %24 = sbr.rel (0) target = $region25
  $region24: #{_critic_forward_discr_impl.1} parent=0 // pred_region
    _
  $region25: #{_critic_forward_discr_impl.1} parent=0 // pred_fallthru
    _
  // Predicated region
  $region26: #{_critic_forward_discr_impl.1} parent=0 // pred_check
    _
  $region27: #{_critic_forward_discr_impl.1} parent=0 // pred_check_branch
    %26 = sbr.rel (0) target = $region29
  $region28: #{_critic_forward_discr_impl.1} parent=0 // pred_region
    _
  $region29: #{_critic_forward_discr_impl.1} parent=0 // pred_fallthru
    _
  // Predicated region
  $region30: #{_critic_forward_discr_impl.1} parent=0 // pred_check
    _
  $region31: #{_critic_forward_discr_impl.1} parent=0 // pred_check_branch
    %28 = sbr.rel (0) target = $region33
  $region32: #{_critic_forward_discr_impl.1} parent=0 // pred_region
    _
  $region33: #{_critic_forward_discr_impl.1} parent=0 // pred_fallthru
    _
  %v29 = vld [vmem:[%s0] sm:$0x7]
  %v30 = vld [vmem:[%s1] sm:$0xff]
  %v31 = vld [vmem:[%s1 + $0x8] sm:$0xff]
  %v32 = vld [vmem:[%s1 + $0x10] sm:$0xff]
  %v33 = vld [vmem:[%s1 + $0x18] sm:$0xff]
  %35 = vset.pattern.permute.xlu0 0
  %36 = vperm.xlu0 %35, %v30
  %v37 = vpop.permute.xlu0 %36
  %40 = vset.pattern.permute.xlu0 0
  %41 = vperm.xlu0 %40, %v31
  %v42 = vpop.permute.xlu0 %41
  %45 = vset.pattern.permute.xlu0 0
  %46 = vperm.xlu0 %45, %v32
  %v47 = vpop.permute.xlu0 %46
  %50 = vset.pattern.permute.xlu0 0
  %51 = vperm.xlu0 %50, %v33
  %v52 = vpop.permute.xlu0 %51
  %v54 = vlaneseq
  %v55 = vshrl.u32 %v54, 7
  %v56 = vsub.s32 0, %v55
  %v57 = vrot.slane %v29, %v56
  %v58 = vmul.f32 %v37, %v57
  %v59 = vmul.f32 %v42, %v57
  %v60 = vmul.f32 %v47, %v57
  %v61 = vmul.f32 %v52, %v57
  %62 = vset.pattern.permute.xlu0 1
  %63 = vperm.xlu0 %62, %v30
  %v64 = vpop.permute.xlu0 %63
  %66 = vset.pattern.permute.xlu0 1
  %67 = vperm.xlu0 %66, %v31
  %v68 = vpop.permute.xlu0 %67
  %70 = vset.pattern.permute.xlu0 1
  %71 = vperm.xlu0 %70, %v32
  %v72 = vpop.permute.xlu0 %71
  %74 = vset.pattern.permute.xlu0 1
  %75 = vperm.xlu0 %74, %v33
  %v76 = vpop.permute.xlu0 %75
  %v78 = vlaneseq
  %v79 = vshrl.u32 %v78, 7
  %v80 = vsub.s32 1, %v79
  %v81 = vrot.slane %v29, %v80
  %v82 = vmul.f32 %v64, %v81
  %v83 = vmul.f32 %v68, %v81
  %v84 = vmul.f32 %v72, %v81
  %v85 = vmul.f32 %v76, %v81
  %v86 = vadd.f32 %v58, %v82
  %v87 = vadd.f32 %v59, %v83
  %v88 = vadd.f32 %v60, %v84
  %v89 = vadd.f32 %v61, %v85
  %v90 = vld [vmem:[%s2] sm:$0xff]
  %v91 = vld [vmem:[%s2 + $0x8] sm:$0xff]
  %v92 = vld [vmem:[%s2 + $0x10] sm:$0xff]
  %v93 = vld [vmem:[%s2 + $0x18] sm:$0xff]
  %95 = vset.pattern.permute.xlu0 0
  %96 = vperm.xlu0 %95, %v90
  %v97 = vpop.permute.xlu0 %96
  %100 = vset.pattern.permute.xlu0 0
  %101 = vperm.xlu0 %100, %v91
  %v102 = vpop.permute.xlu0 %101
  %105 = vset.pattern.permute.xlu0 0
  %106 = vperm.xlu0 %105, %v92
  %v107 = vpop.permute.xlu0 %106
  %110 = vset.pattern.permute.xlu0 0
  %111 = vperm.xlu0 %110, %v93
  %v112 = vpop.permute.xlu0 %111
  %v114 = vadd.f32 %v86, %v97
  %v115 = vadd.f32 %v87, %v102
  %v116 = vadd.f32 %v88, %v107
  %v117 = vadd.f32 %v89, %v112
  %v118 = vmax.f32 %v114, 0.0
  %v119 = vmax.f32 %v115, 0.0
  %v120 = vmax.f32 %v116, 0.0
  %v121 = vmax.f32 %v117, 0.0
  %v122 = vld [vmem:[%s3] sm:$0xff]
  %v123 = vld [vmem:[%s3 + $0x8] sm:$0xff]
  %v124 = vld [vmem:[%s3 + $0x10] sm:$0xff]
  %v125 = vld [vmem:[%s3 + $0x18] sm:$0xff]
  %v126 = vld [vmem:[%s4] sm:$0xff]
  %v127 = vld [vmem:[%s4 + $0x8] sm:$0xff]
  %v128 = vld [vmem:[%s4 + $0x10] sm:$0xff]
  %v129 = vld [vmem:[%s4 + $0x18] sm:$0xff]
  %131 = vset.pattern.permute.xlu0 0
  %132 = vperm.xlu0 %131, %v126
  %v133 = vpop.permute.xlu0 %132
  %136 = vset.pattern.permute.xlu0 0
  %137 = vperm.xlu0 %136, %v127
  %v138 = vpop.permute.xlu0 %137
  %141 = vset.pattern.permute.xlu0 0
  %142 = vperm.xlu0 %141, %v128
  %v143 = vpop.permute.xlu0 %142
  %146 = vset.pattern.permute.xlu0 0
  %147 = vperm.xlu0 %146, %v129
  %v148 = vpop.permute.xlu0 %147
  %vm150 = vcmask 261120
  %v152 = vsel %vm150, %v122, 0
  %v155 = vsel %vm150, %v123, 0
  %v158 = vsel %vm150, %v124, 0
  %v161 = vsel %vm150, %v125, 0
  %163 = vmatprep.subr.mxu0 0.0
  %164 = vmatpush1.msra.mxu0 0.0
  %165 = vmatprep.subr.mxu0 0.0
  %166 = vmatpush1.msra.mxu0 0.0
  %167 = vmatprep.subr.mxu0 0.0
  %168 = vmatpush1.msra.mxu0 0.0
  %169 = vmatprep.subr.mxu0 0.0
  %170 = vmatpush1.msra.mxu0 0.0
  %171 = vmatprep.subr.mxu0 0.0
  %172 = vmatpush1.msra.mxu0 0.0
  %173 = vmatprep.subr.mxu0 0.0
  %174 = vmatpush1.msra.mxu0 0.0
  %175 = vmatprep.subr.mxu0 0.0
  %176 = vmatpush1.msra.mxu0 0.0
  %177 = vmatprep.subr.mxu0 0.0
  %178 = vmatpush1.msra.mxu0 0.0
  %179 = vmatprep.subr.mxu0 0.0
  %180 = vmatpush1.msra.mxu0 0.0
  %181 = vmatprep.subr.mxu0 0.0
  %182 = vmatpush1.msra.mxu0 0.0
  %183 = vmatprep.subr.mxu0 0.0
  %184 = vmatpush1.msra.mxu0 0.0
  %185 = vmatprep.subr.mxu0 0.0
  %186 = vmatpush1.msra.mxu0 0.0
  %187 = vmatprep.subr.mxu0 0.0
  %188 = vmatpush1.msra.mxu0 %v121
  %189 = vmatprep.subr.mxu0 0.0
  %190 = vmatpush1.msra.mxu0 %v120
  %191 = vmatprep.subr.mxu0 0.0
  %192 = vmatpush1.msra.mxu0 %v119
  %193 = vmatprep.subr.mxu0 0.0
  %194 = vmatpush1.msra.mxu0 %v118
  %195 = vmatprep.subr.mxu0 0.0
  %196 = vmatpush2.msra.mxu0 0.0
  %197 = vmatprep.subr.mxu0 0.0
  %198 = vmatpush2.msra.mxu0 0.0
  %199 = vmatprep.subr.mxu0 0.0
  %200 = vmatpush2.msra.mxu0 0.0
  %201 = vmatprep.subr.mxu0 0.0
  %202 = vmatpush2.msra.mxu0 0.0
  %203 = vmatprep.subr.mxu0 0.0
  %204 = vmatpush2.msra.mxu0 0.0
  %205 = vmatprep.subr.mxu0 0.0
  %206 = vmatpush2.msra.mxu0 0.0
  %207 = vmatprep.subr.mxu0 0.0
  %208 = vmatpush2.msra.mxu0 0.0
  %209 = vmatprep.subr.mxu0 0.0
  %210 = vmatpush2.msra.mxu0 0.0
  %211 = vmatprep.subr.mxu0 0.0
  %212 = vmatpush2.msra.mxu0 0.0
  %213 = vmatprep.subr.mxu0 0.0
  %214 = vmatpush2.msra.mxu0 0.0
  %215 = vmatprep.subr.mxu0 0.0
  %216 = vmatpush2.msra.mxu0 0.0
  %217 = vmatprep.subr.mxu0 0.0
  %218 = vmatpush2.msra.mxu0 0.0
  %219 = vmatprep.subr.mxu0 0.0
  %220 = vmatpush2.msra.mxu0 0.0
  %221 = vmatprep.subr.mxu0 0.0
  %222 = vmatpush2.msra.mxu0 0.0
  %223 = vmatprep.subr.mxu0 0.0
  %224 = vmatpush2.msra.mxu0 0.0
  %225 = vmatprep.subr.mxu0 0.0
  %226 = vmatpush2.msra.mxu0 0.0
  %227 = vmatprep.mubr.f32.mxu0 0.0
  %228 = vmatmul.mubr.f32.gmra.mxu0 %v152
  %v229 = vpop.f32.mrf.mxu0
  %v230 = vadd.f32 %v133, %v229
  %v231 = vpop.f32.mrf.mxu0
  %232 = vmatprep.mubr.f32.mxu0 0.0
  %233 = vmatmul.mubr.f32.gmra.mxu0 %v155
  %v234 = vpop.f32.mrf.mxu0
  %v235 = vadd.f32 %v138, %v234
  %v236 = vpop.f32.mrf.mxu0
  %237 = vmatprep.mubr.f32.mxu0 0.0
  %238 = vmatmul.mubr.f32.gmra.mxu0 %v158
  %v239 = vpop.f32.mrf.mxu0
  %v240 = vadd.f32 %v143, %v239
  %v241 = vpop.f32.mrf.mxu0
  %242 = vmatprep.mubr.f32.mxu0 0.0
  %243 = vmatmul.mubr.f32.gmra.mxu0 %v161
  %v244 = vpop.f32.mrf.mxu0
  %v245 = vadd.f32 %v148, %v244
  %v246 = vpop.f32.mrf.mxu0
  %247 = vdwg.mxu0
  %v248 = vmax.f32 %v230, 0.0
  %v249 = vmax.f32 %v235, 0.0
  %v250 = vmax.f32 %v240, 0.0
  %v251 = vmax.f32 %v245, 0.0
  %v252 = vld [vmem:[%s5] sm:$0xf]
  %v253 = vld [vmem:[%s6] sm:$0xf]
  %255 = vset.pattern.permute.xlu0 0
  %256 = vperm.xlu0 %255, %v253
  %v257 = vpop.permute.xlu0 %256
  %v260 = vsel %vm150, %v252, 0
  %262 = vmatprep.subr.mxu0 0.0
  %263 = vmatpush1.msra.mxu0 0.0
  %264 = vmatprep.subr.mxu0 0.0
  %265 = vmatpush1.msra.mxu0 0.0
  %266 = vmatprep.subr.mxu0 0.0
  %267 = vmatpush1.msra.mxu0 0.0
  %268 = vmatprep.subr.mxu0 0.0
  %269 = vmatpush1.msra.mxu0 0.0
  %270 = vmatprep.subr.mxu0 0.0
  %271 = vmatpush1.msra.mxu0 0.0
  %272 = vmatprep.subr.mxu0 0.0
  %273 = vmatpush1.msra.mxu0 0.0
  %274 = vmatprep.subr.mxu0 0.0
  %275 = vmatpush1.msra.mxu0 0.0
  %276 = vmatprep.subr.mxu0 0.0
  %277 = vmatpush1.msra.mxu0 0.0
  %278 = vmatprep.subr.mxu0 0.0
  %279 = vmatpush1.msra.mxu0 0.0
  %280 = vmatprep.subr.mxu0 0.0
  %281 = vmatpush1.msra.mxu0 0.0
  %282 = vmatprep.subr.mxu0 0.0
  %283 = vmatpush1.msra.mxu0 0.0
  %284 = vmatprep.subr.mxu0 0.0
  %285 = vmatpush1.msra.mxu0 0.0
  %286 = vmatprep.subr.mxu0 0.0
  %287 = vmatpush1.msra.mxu0 %v251
  %288 = vmatprep.subr.mxu0 0.0
  %289 = vmatpush1.msra.mxu0 %v250
  %290 = vmatprep.subr.mxu0 0.0
  %291 = vmatpush1.msra.mxu0 %v249
  %292 = vmatprep.subr.mxu0 0.0
  %293 = vmatpush1.msra.mxu0 %v248
  %294 = vmatprep.subr.mxu0 0.0
  %295 = vmatpush2.msra.mxu0 0.0
  %296 = vmatprep.subr.mxu0 0.0
  %297 = vmatpush2.msra.mxu0 0.0
  %298 = vmatprep.subr.mxu0 0.0
  %299 = vmatpush2.msra.mxu0 0.0
  %300 = vmatprep.subr.mxu0 0.0
  %301 = vmatpush2.msra.mxu0 0.0
  %302 = vmatprep.subr.mxu0 0.0
  %303 = vmatpush2.msra.mxu0 0.0
  %304 = vmatprep.subr.mxu0 0.0
  %305 = vmatpush2.msra.mxu0 0.0
  %306 = vmatprep.subr.mxu0 0.0
  %307 = vmatpush2.msra.mxu0 0.0
  %308 = vmatprep.subr.mxu0 0.0
  %309 = vmatpush2.msra.mxu0 0.0
  %310 = vmatprep.subr.mxu0 0.0
  %311 = vmatpush2.msra.mxu0 0.0
  %312 = vmatprep.subr.mxu0 0.0
  %313 = vmatpush2.msra.mxu0 0.0
  %314 = vmatprep.subr.mxu0 0.0
  %315 = vmatpush2.msra.mxu0 0.0
  %316 = vmatprep.subr.mxu0 0.0
  %317 = vmatpush2.msra.mxu0 0.0
  %318 = vmatprep.subr.mxu0 0.0
  %319 = vmatpush2.msra.mxu0 0.0
  %320 = vmatprep.subr.mxu0 0.0
  %321 = vmatpush2.msra.mxu0 0.0
  %322 = vmatprep.subr.mxu0 0.0
  %323 = vmatpush2.msra.mxu0 0.0
  %324 = vmatprep.subr.mxu0 0.0
  %325 = vmatpush2.msra.mxu0 0.0
  %326 = vmatprep.mubr.f32.mxu0 0.0
  %327 = vmatmul.mubr.f32.gmra.mxu0 %v260
  %v328 = vpop.f32.mrf.mxu0
  %v329 = vadd.f32 %v257, %v328
  %v330 = vpop.f32.mrf.mxu0
  %331 = vdwg.mxu0
  %v332 = vcvt.f32.s32.to.zero.pseudo %v29
  %v333 = vld [vmem:[%s7] sm:$0xf]
  %vm334 = vcmp.eq.s32.totalorder %v332, 0
  %v335 = vsel %vm334, 1, 0
  %v336 = vlaneseq
  %v337 = vshrl.u32 %v336, 7
  %v338 = vsub.s32 2, %v337
  %v339 = vrot.slane %v335, %v338
  %vm340 = vcmp.eq.s32.totalorder %v339, 1
  %342 = vset.pattern.permute.xlu0 0
  %343 = vperm.xlu0 %342, %v333
  %v344 = vpop.permute.xlu0 %343
  %v346 = vsel %vm340, %v344, 0.0
  %v347 = vadd.f32 %v329, %v346
  %vm348 = vcmp.eq.s32.totalorder %v332, 1
  %v349 = vsel %vm348, 1, 0
  %v350 = vlaneseq
  %v351 = vshrl.u32 %v350, 7
  %v352 = vsub.s32 2, %v351
  %v353 = vrot.slane %v349, %v352
  %vm354 = vcmp.eq.s32.totalorder %v353, 1
  %355 = vset.pattern.permute.xlu0 1
  %356 = vperm.xlu0 %355, %v333
  %v357 = vpop.permute.xlu0 %356
  %v359 = vsel %vm354, %v357, 0.0
  %v360 = vadd.f32 %v347, %v359
  %vm361 = vcmp.eq.s32.totalorder %v332, 2
  %v362 = vsel %vm361, 1, 0
  %v363 = vlaneseq
  %v364 = vshrl.u32 %v363, 7
  %v365 = vsub.s32 2, %v364
  %v366 = vrot.slane %v362, %v365
  %vm367 = vcmp.eq.s32.totalorder %v366, 1
  %368 = vset.pattern.permute.xlu0 2
  %369 = vperm.xlu0 %368, %v333
  %v370 = vpop.permute.xlu0 %369
  %v372 = vsel %vm367, %v370, 0.0
  %v373 = vadd.f32 %v360, %v372
  %vm374 = vcmp.eq.s32.totalorder %v332, 3
  %v375 = vsel %vm374, 1, 0
  %v376 = vlaneseq
  %v377 = vshrl.u32 %v376, 7
  %v378 = vsub.s32 2, %v377
  %v379 = vrot.slane %v375, %v378
  %vm380 = vcmp.eq.s32.totalorder %v379, 1
  %381 = vset.pattern.permute.xlu0 3
  %382 = vperm.xlu0 %381, %v333
  %v383 = vpop.permute.xlu0 %382
  %v385 = vsel %vm380, %v383, 0.0
  %v386 = vadd.f32 %v373, %v385
  %vm387 = vcmp.eq.s32.totalorder %v332, 4
  %v388 = vsel %vm387, 1, 0
  %v389 = vlaneseq
  %v390 = vshrl.u32 %v389, 7
  %v391 = vsub.s32 2, %v390
  %v392 = vrot.slane %v388, %v391
  %vm393 = vcmp.eq.s32.totalorder %v392, 1
  %394 = vset.pattern.permute.xlu0 4
  %395 = vperm.xlu0 %394, %v333
  %v396 = vpop.permute.xlu0 %395
  %v398 = vsel %vm393, %v396, 0.0
  %v399 = vadd.f32 %v386, %v398
  %400 = vst [vmem:[%s8] sm:$0xf] %v399
  // Predicated region
  $region34: #{_critic_forward_discr_impl.1} parent=0 // pred_check
    _
  $region35: #{_critic_forward_discr_impl.1} parent=0 // pred_check_branch
    %402 = sbr.rel (0) target = $region37
  $region36: #{_critic_forward_discr_impl.1} parent=0 // pred_region
    _
  $region37: #{_critic_forward_discr_impl.1} parent=0 // pred_fallthru
    _
  // Predicated region
  $region38: #{_critic_forward_discr_impl.1} parent=0 // pred_check
    _
  $region39: #{_critic_forward_discr_impl.1} parent=0 // pred_check_branch
    %404 = sbr.rel (0) target = $region41
  $region40: #{_critic_forward_discr_impl.1} parent=0 // pred_region
    _
  $region41: #{_critic_forward_discr_impl.1} parent=0 // pred_fallthru
    _

</llo_original>
